<compile_context>
chip_gen: v5e
topology: v5e:2x2
jax: 0.10.0
libtpu: 0.0.40
codegen_flags: <defaults>
</compile_context>

<pallas_src>
import jax
import jax.numpy as jnp
from jax import lax
from jax.experimental import pallas as pl
from jax.experimental.pallas import tpu as pltpu


def _round_up(v: int, m: int) -> int:
    return ((v + m - 1) // m) * m


def _pick_ktile(dim: int, max_tile: int, align: int = 128) -> int:
    """Largest multiple of `align` <= max_tile that divides `dim` exactly.
    Exact divisibility is required: partial K blocks would feed garbage into
    the accumulation.  Falls back to the full dim (single K step)."""
    if dim <= max_tile:
        return dim
    t = (max_tile // align) * align
    while t >= align:
        if dim % t == 0:
            return t
        t -= align
    # TODO(synk): pad/mask the K tail instead of a full-K fallback for odd H.
    return dim


def _vmem_footprint(tm, tn, tk, r, in_isize, out_isize):
    """Approximate double-buffered VMEM footprint of one grid step (bytes)."""
    lane = 128
    r_pad = _round_up(max(r, 1), lane)
    tn_pad = _round_up(tn, lane)
    fp = 0
    fp += 2 * tm * tk * in_isize        # x tile
    fp += 2 * tn * tk * in_isize        # W tile
    fp += 2 * tn_pad * in_isize         # bias tile
    fp += 2 * tm * r_pad * in_isize     # t = x @ lora_A tile
    fp += 2 * tn * r_pad * in_isize     # lora_B tile
    fp += 2 * tm * tn * out_isize       # output tile
    fp += tm * tn * 4                   # f32 accumulator scratch
    return fp


def lora_linear_kernel(x_ref, w_ref, b_ref, t_ref, lb_ref, o_ref, acc_ref):
    # x_ref : (tm, tk)  K-slice of flattened input rows
    # w_ref : (tn, tk)  N,K-tile of base Linear weight (PyTorch convention)
    # b_ref : (1, tn)   N-tile of base Linear bias
    # t_ref : (tm, r)   precomputed x @ lora_A rows (K-independent)
    # lb_ref: (tn, r)   N-tile of lora_B
    k = pl.program_id(2)

    @pl.when(k == 0)
    def _init():
        acc_ref[...] = jnp.zeros_like(acc_ref)

    # base K-step: x (tm,tk) . W (tn,tk)^T  -- contract dim 1 of both operands,
    # no physical transpose, f32 MXU accumulator.
    acc_ref[...] += lax.dot_general(
        x_ref[...], w_ref[...], (((1,), (1,)), ((), ())),
        preferred_element_type=jnp.float32)

    @pl.when(k == pl.num_programs(2) - 1)
    def _finalize():
        # LoRA delta: (x @ lora_A) @ lora_B^T.  r is tiny, so this is a small
        # epilogue matmul executed once per (i, j) tile (not per K step).
        lora = lax.dot_general(
            t_ref[...], lb_ref[...], (((1,), (1,)), ((), ())),
            preferred_element_type=jnp.float32)
        o_ref[...] = (acc_ref[...] + b_ref[...].astype(jnp.float32) + lora
                      ).astype(o_ref.dtype)


def lora_linear(x, w, bias, lora_A, lora_B, *, tm=None, tn=512, tk_max=2048):
    """x: [B, S, H_in]; w: [H_out, H_in]; bias: [H_out];
    lora_A: [H_out, r]; lora_B: [H_in, r]."""
    B, S, H_in = x.shape
    H_out = w.shape[0]
    r = lora_A.shape[1]
    assert w.shape == (H_out, H_in)
    assert lora_A.shape == (H_out, r) and lora_B.shape == (H_in, r)
    # As in the PyTorch module, the LoRA path only type-checks when square.
    assert H_in == H_out, "LoRALayerWrapper.forward requires a square Linear"

    x_flat = x.reshape(-1, H_in)
    M = x_flat.shape[0]
    in_isize = jnp.dtype(x.dtype).itemsize
    out_isize = in_isize

    # ---- tile selection (dtype/generation aware) ----------------------------
    if tm is None:
        tm = 1024 if in_isize <= 2 else 512
    tm = min(_round_up(tm, 8), _round_up(M, 8))
    tn = min(tn, H_out)
    if H_out > tn:
        tn = max(128, (tn // 128) * 128)          # lane-dense N tile
    tk = _pick_ktile(H_in, tk_max)

    # ---- VMEM budget --------------------------------------------------------
    try:
        vmem_cap = pltpu.get_tpu_info().vmem_capacity_bytes
    except Exception:
        vmem_cap = 64 * 1024 * 1024
    vmem_limit = int(vmem_cap * 0.8)              # leave compiler headroom
    budget = vmem_limit - (2 << 20)
    while _vmem_footprint(tm, tn, tk, r, in_isize, out_isize) > budget and tm > 256:
        tm = max(256, _round_up(tm // 2, 8))
    while _vmem_footprint(tm, tn, tk, r, in_isize, out_isize) > budget and tk > 128:
        new_tk = _pick_ktile(H_in, max(128, tk // 2))
        if new_tk >= tk:
            break
        tk = new_tk

    gm = pl.cdiv(M, tm)
    gn = pl.cdiv(H_out, tn)
    gk = H_in // tk                               # tk divides H_in (or == H_in)

    # LoRA left factor hoisted out of the kernel: tiny (M, r) matmul in XLA.
    t = jnp.dot(x_flat, lora_A, preferred_element_type=jnp.float32).astype(x.dtype)
    bias2d = bias.reshape(1, H_out)

    # Cost hint: W is re-streamed once per row tile; x is re-streamed per N tile
    # only when the K axis is actually split (Pallas skips the re-DMA at gk==1).
    w_bytes = w.size * jnp.dtype(w.dtype).itemsize
    x_bytes = x_flat.size * in_isize
    bytes_accessed = (gm * w_bytes
                      + (x_bytes if gk == 1 else gn * x_bytes)
                      + M * H_out * out_isize
                      + bias.size * jnp.dtype(bias.dtype).itemsize
                      + t.size * in_isize
                      + lora_B.size * jnp.dtype(lora_B.dtype).itemsize)
    flops = 2 * M * H_in * H_out + 2 * M * r * H_out

    out_flat = pl.pallas_call(
        lora_linear_kernel,
        out_shape=jax.ShapeDtypeStruct((M, H_out), x.dtype),
        grid_spec=pltpu.PrefetchScalarGridSpec(
            num_scalar_prefetch=0,
            grid=(gm, gn, gk),
            in_specs=[
                pl.BlockSpec((tm, tk), lambda i, j, k: (i, k)),   # x rows (K-tiled)
                pl.BlockSpec((tn, tk), lambda i, j, k: (j, k)),   # W (N,K tile)
                pl.BlockSpec((1, tn), lambda i, j, k: (0, j)),    # bias (N tile)
                pl.BlockSpec((tm, r), lambda i, j, k: (i, 0)),    # t = x @ lora_A
                pl.BlockSpec((tn, r), lambda i, j, k: (j, 0)),    # lora_B (N tile)
            ],
            out_specs=pl.BlockSpec((tm, tn), lambda i, j, k: (i, j)),
            scratch_shapes=[pltpu.VMEM((tm, tn), jnp.float32)],
        ),
        compiler_params=pltpu.CompilerParams(
            dimension_semantics=("parallel", "parallel", "arbitrary"),
            vmem_limit_bytes=vmem_limit),
        cost_estimate=pl.CostEstimate(
            flops=flops, transcendentals=0, bytes_accessed=bytes_accessed),
    )(x_flat, w, bias2d, t, lora_B)

    # loras_out.view(B, S, -1) added to base_out -> same reshape on the sum.
    return out_flat.reshape(B, S, H_out)


if __name__ == "__main__":
    # Small shapes consistent with the module: batch=2, seq=8, hidden=32, rank=8
    B, S, H, rank = 2, 8, 32, 8
    mid = rank // 2

    key = jax.random.PRNGKey(0)
    kx, kw, kb, ka, kbb = jax.random.split(key, 5)

    x = jax.random.normal(kx, (B, S, H), dtype=jnp.float32)

    # Deterministic "base_module" = Linear(H, H) parameters.
    w = jax.random.normal(kw, (H, H), dtype=jnp.float32) * 0.05
    bias = jax.random.normal(kb, (H,), dtype=jnp.float32) * 0.05

    # LoRA params, initialized exactly like the module's __init__:
    # A = randn(out, r) with A[:, mid:] = 0 ; B = randn(in, r) with B[:, :mid] = 0
    lora_A = jax.random.normal(ka, (H, rank), dtype=jnp.float32)
    lora_A = lora_A.at[:, mid:].set(0.0)
    lora_B = jax.random.normal(kbb, (H, rank), dtype=jnp.float32)
    lora_B = lora_B.at[:, :mid].set(0.0)

    def ref_forward(x, w, bias, A, Bm):
        # Pure-JAX reference (same op order as the PyTorch forward).
        x_flat = x.reshape(-1, x.shape[-1])
        base = x_flat @ w.T + bias
        lrw = Bm @ A.T
        lora = x_flat @ lrw.T
        return (base + lora).reshape(x.shape[0], x.shape[1], -1)

    out = jax.block_until_ready(lora_linear(x, w, bias, lora_A, lora_B))
    ref = ref_forward(x, w, bias, lora_A, lora_B)
    assert out.shape == (B, S, H)
    assert jnp.allclose(out, ref, atol=1e-5, rtol=1e-5)

    # Extra check with dense (non-zeroed) LoRA factors so the LoRA path is
    # numerically exercised (the module's init makes B @ A.T exactly zero).
    ka2, kb2 = jax.random.split(jax.random.PRNGKey(1))
    A2 = jax.random.normal(ka2, (H, rank), dtype=jnp.float32)
    B2 = jax.random.normal(kb2, (H, rank), dtype=jnp.float32)
    out2 = jax.block_until_ready(lora_linear(x, w, bias, A2, B2))
    ref2 = ref_forward(x, w, bias, A2, B2)
    assert jnp.allclose(out2, ref2, atol=1e-4, rtol=1e-5)

    print("KERNEL_OK")
</pallas_src>

<mosaic_0001>
module attributes {stable_mosaic.version = 11 : i64} {
  func.func @lora_linear_kernel(%arg0: i32, %arg1: i32, %arg2: i32, %arg3: memref<16x32xf32, #tpu.memory_space<vmem>>, %arg4: memref<32x32xf32, #tpu.memory_space<vmem>>, %arg5: memref<1x32xf32, #tpu.memory_space<vmem>>, %arg6: memref<16x8xf32, #tpu.memory_space<vmem>>, %arg7: memref<32x8xf32, #tpu.memory_space<vmem>>, %arg8: memref<16x32xf32, #tpu.memory_space<vmem>>, %arg9: memref<16x32xf32, #tpu.memory_space<vmem>>) attributes {dimension_semantics = [#tpu.dimension_semantics<parallel>, #tpu.dimension_semantics<parallel>, #tpu.dimension_semantics<arbitrary>], iteration_bounds = array<i64: 1, 1, 1>, scalar_prefetch = 0 : i64, scratch_operands = 1 : i64, tpu.core_type = #tpu.core_type<tc>, window_params = [{transform_indices = @transform_0, window_bounds = array<i64: 16, 32>}, {transform_indices = @transform_1, window_bounds = array<i64: 32, 32>}, {transform_indices = @transform_2, window_bounds = array<i64: 1, 32>}, {transform_indices = @transform_3, window_bounds = array<i64: 16, 8>}, {transform_indices = @transform_4, window_bounds = array<i64: 32, 8>}, {transform_indices = @transform_5, window_bounds = array<i64: 16, 32>}]} {
    %c0_i32 = arith.constant 0 : i32
    %0 = arith.cmpi eq, %arg2, %c0_i32 : i32
    %1 = arith.extui %0 : i1 to i32
    %c0_i32_0 = arith.constant 0 : i32
    %2 = arith.cmpi ne, %1, %c0_i32_0 : i32
    scf.if %2 {
      %cst_10 = arith.constant 0.000000e+00 : f32
      %12 = vector.broadcast %cst_10 : f32 to vector<16x32xf32>
      %c0_11 = arith.constant 0 : index
      %c0_12 = arith.constant 0 : index
      %13 = vector.load %arg9[%c0_11, %c0_12] : memref<16x32xf32, #tpu.memory_space<vmem>>, vector<16x32xf32>
      tpu.vector_store %arg9[%c0_11, %c0_12], %12 {strides = array<i32>} : memref<16x32xf32, #tpu.memory_space<vmem>>, vector<16x32xf32>,
    } else {
    }
    %c0 = arith.constant 0 : index
    %c0_1 = arith.constant 0 : index
    %3 = vector.load %arg9[%c0, %c0_1] : memref<16x32xf32, #tpu.memory_space<vmem>>, vector<16x32xf32>
    %c0_2 = arith.constant 0 : index
    %c0_3 = arith.constant 0 : index
    %4 = vector.load %arg3[%c0_2, %c0_3] : memref<16x32xf32, #tpu.memory_space<vmem>>, vector<16x32xf32>
    %c0_4 = arith.constant 0 : index
    %c0_5 = arith.constant 0 : index
    %5 = vector.load %arg4[%c0_4, %c0_5] : memref<32x32xf32, #tpu.memory_space<vmem>>, vector<32x32xf32>
    %cst = arith.constant dense<0.000000e+00> : vector<16x32xf32>
    %6 = tpu.matmul %4, %5, %cst {dimension_numbers = #tpu.dot_dimension_numbers<[1], [1], [0], [0], [0, 0, 1, 0], [], []>} : vector<16x32xf32>, vector<32x32xf32>, vector<16x32xf32> -> vector<16x32xf32>
    %7 = arith.addf %3, %6 : vector<16x32xf32>
    %c0_6 = arith.constant 0 : index
    %c0_7 = arith.constant 0 : index
    %8 = vector.load %arg9[%c0_6, %c0_7] : memref<16x32xf32, #tpu.memory_space<vmem>>, vector<16x32xf32>
    tpu.vector_store %arg9[%c0_6, %c0_7], %7 {strides = array<i32>} : memref<16x32xf32, #tpu.memory_space<vmem>>, vector<16x32xf32>,
    %c0_i32_8 = arith.constant 0 : i32
    %9 = arith.cmpi eq, %arg2, %c0_i32_8 : i32
    %10 = arith.extui %9 : i1 to i32
    %c0_i32_9 = arith.constant 0 : i32
    %11 = arith.cmpi ne, %10, %c0_i32_9 : i32
    scf.if %11 {
      %c0_10 = arith.constant 0 : index
      %c0_11 = arith.constant 0 : index
      %12 = vector.load %arg6[%c0_10, %c0_11] : memref<16x8xf32, #tpu.memory_space<vmem>>, vector<16x8xf32>
      %c0_12 = arith.constant 0 : index
      %c0_13 = arith.constant 0 : index
      %13 = vector.load %arg7[%c0_12, %c0_13] : memref<32x8xf32, #tpu.memory_space<vmem>>, vector<32x8xf32>
      %cst_14 = arith.constant dense<0.000000e+00> : vector<16x32xf32>
      %14 = tpu.matmul %12, %13, %cst_14 {dimension_numbers = #tpu.dot_dimension_numbers<[1], [1], [0], [0], [0, 0, 1, 0], [], []>} : vector<16x8xf32>, vector<32x8xf32>, vector<16x32xf32> -> vector<16x32xf32>
      %c0_15 = arith.constant 0 : index
      %c0_16 = arith.constant 0 : index
      %15 = vector.load %arg9[%c0_15, %c0_16] : memref<16x32xf32, #tpu.memory_space<vmem>>, vector<16x32xf32>
      %c0_17 = arith.constant 0 : index
      %c0_18 = arith.constant 0 : index
      %16 = vector.load %arg5[%c0_17, %c0_18] : memref<1x32xf32, #tpu.memory_space<vmem>>, vector<1x32xf32>
      %17 = vector.broadcast %16 : vector<1x32xf32> to vector<16x32xf32>
      %18 = arith.addf %15, %17 : vector<16x32xf32>
      %19 = arith.addf %18, %14 : vector<16x32xf32>
      %c0_19 = arith.constant 0 : index
      %c0_20 = arith.constant 0 : index
      %20 = vector.load %arg8[%c0_19, %c0_20] : memref<16x32xf32, #tpu.memory_space<vmem>>, vector<16x32xf32>
      tpu.vector_store %arg8[%c0_19, %c0_20], %19 {strides = array<i32>} : memref<16x32xf32, #tpu.memory_space<vmem>>, vector<16x32xf32>,
    } else {
    }
    return
  }
  func.func @transform_0(%arg0: i32, %arg1: i32, %arg2: i32) -> (i32, i32) {
    %c0_i32 = arith.constant 0 : i32
    return %arg0, %arg2 : i32, i32
  }
  func.func @transform_1(%arg0: i32, %arg1: i32, %arg2: i32) -> (i32, i32) {
    %c0_i32 = arith.constant 0 : i32
    return %arg1, %arg2 : i32, i32
  }
  func.func @transform_2(%arg0: i32, %arg1: i32, %arg2: i32) -> (i32, i32) {
    %c0_i32 = arith.constant 0 : i32
    %c0_i32_0 = arith.constant 0 : i32
    return %c0_i32, %arg1 : i32, i32
  }
  func.func @transform_3(%arg0: i32, %arg1: i32, %arg2: i32) -> (i32, i32) {
    %c0_i32 = arith.constant 0 : i32
    %c0_i32_0 = arith.constant 0 : i32
    return %arg0, %c0_i32 : i32, i32
  }
  func.func @transform_4(%arg0: i32, %arg1: i32, %arg2: i32) -> (i32, i32) {
    %c0_i32 = arith.constant 0 : i32
    %c0_i32_0 = arith.constant 0 : i32
    return %arg1, %c0_i32 : i32, i32
  }
  func.func @transform_5(%arg0: i32, %arg1: i32, %arg2: i32) -> (i32, i32) {
    %c0_i32 = arith.constant 0 : i32
    return %arg0, %arg1 : i32, i32
  }
}

</mosaic_0001>

<llo_original>
// kernel: tpu_custom_call.1
$region0: #{tpu_custom_call.1}
  #allocation0 [shape = 'u32[]', space=smem, size = 0x4, offset = 0x4, fixed_abs, tag = 'smem constant byte address 0x4 - core index']
  #allocation1 [shape = 'u32[72,128]{1,0:T(1,128)}', space=vmem, size = 0x9000, scoped, tag = 'internal scratch']
  #allocation2 [shape = 'f32[16,32]{1,0:T(8,128)}', space=vmem, size = 0x2000, scoped, tag = 'scratch operand']
  %s0 = inlined_call_operand.vmem [shape: f32[16,32], index: 0, kind: input, shape index: {}]
  %s1 = inlined_call_operand.vmem [shape: f32[32,32], index: 1, kind: input, shape index: {}]
  %s2 = inlined_call_operand.vmem [shape: f32[1,32], index: 2, kind: input, shape index: {}]
  %s3 = inlined_call_operand.vmem [shape: f32[16,8], index: 3, kind: input, shape index: {}]
  %s4 = inlined_call_operand.vmem [shape: f32[32,8], index: 4, kind: input, shape index: {}]
  %s5 = inlined_call_operand.hbm [shape: f32[16,32], index: 5, kind: output, shape index: {}]
  %s6 = sld [smem:[#allocation0]]
  $region38: #{tpu_custom_call.1} parent=0
    _
  %s8 = ssub.s32 1, %s6
  %s9 = scalar_select 0, %s8, %s6
  $region1: #{tpu_custom_call.1} parent=0
    #allocation3 [shape = 'u8[8192]{0}', space=vmem, size = 0x2000, scoped, tag = 'output window, operand 0, single buffered']
    #allocation4 [shape = 's32[1]{0}', space=sflag, size = 0x4, scoped, tag = 'scoped memory for tpu_custom_call.1']
    %10 = vsyncpa [#allocation4], 0
    // Predicated region
    $region2: #{tpu_custom_call.1} parent=1 // pred_check
      _
    $region3: #{tpu_custom_call.1} parent=1 // pred_check_branch
      %12 = sbr.rel (0) target = $region5
    $region4: #{tpu_custom_call.1} parent=1 // pred_region
      _
    $region5: #{tpu_custom_call.1} parent=1 // pred_fallthru
      _
    // Predicated region
    $region6: #{tpu_custom_call.1} parent=1 // pred_check
      _
    $region7: #{tpu_custom_call.1} parent=1 // pred_check_branch
      %14 = sbr.rel (0) target = $region9
    $region8: #{tpu_custom_call.1} parent=1 // pred_region
      _
    $region9: #{tpu_custom_call.1} parent=1 // pred_fallthru
      _
    // Predicated region
    $region10: #{tpu_custom_call.1} parent=1 // pred_check
      _
    $region11: #{tpu_custom_call.1} parent=1 // pred_check_branch
      %16 = sbr.rel (0) target = $region13
    $region12: #{tpu_custom_call.1} parent=1 // pred_region
      _
    $region13: #{tpu_custom_call.1} parent=1 // pred_fallthru
      _
    // Predicated region
    $region14: #{tpu_custom_call.1} parent=1 // pred_check
      _
    $region15: #{tpu_custom_call.1} parent=1 // pred_check_branch
      %18 = sbr.rel (0) target = $region17
    $region16: #{tpu_custom_call.1} parent=1 // pred_region
      _
    $region17: #{tpu_custom_call.1} parent=1 // pred_fallthru
      _
    // Predicated region
    $region18: #{tpu_custom_call.1} parent=1 // pred_check
      _
    $region19: #{tpu_custom_call.1} parent=1 // pred_check_branch
      %20 = sbr.rel (0) target = $region21
    $region20: #{tpu_custom_call.1} parent=1 // pred_region
      _
    $region21: #{tpu_custom_call.1} parent=1 // pred_fallthru
      _
    %p21 = scmp.eq.s32.totalorder 0, 0
    // Predicated region
    $region22: #{tpu_custom_call.1} parent=1 // pred_check
      %p22 = pneg %p21
    $region23: #{tpu_custom_call.1} parent=1 // pred_check_branch
      %24 = sbr.rel (%p22) target = $region25
    $region24: #{tpu_custom_call.1} parent=1 // pred_region
      %vm25 = vcmask 261120
      %26 = vst.msk [vmem:[#allocation2] sm:$0xff] %vm25, 0.0
      %27 = vst.msk [vmem:[#allocation2 + $0x8] sm:$0xff] %vm25, 0.0
    $region25: #{tpu_custom_call.1} parent=1 // pred_fallthru
      _
    %v28 = vld [vmem:[#allocation2] sm:$0xff]
    %v29 = vld [vmem:[#allocation2 + $0x8] sm:$0xff]
    %v30 = vld [vmem:[%s0] sm:$0xff]
    %v31 = vld [vmem:[%s0 + $0x8] sm:$0xff]
    %v32 = vld [vmem:[%s1] sm:$0xff]
    %v33 = vld [vmem:[%s1 + $0x8] sm:$0xff]
    %v34 = vld [vmem:[%s1 + $0x10] sm:$0xff]
    %v35 = vld [vmem:[%s1 + $0x18] sm:$0xff]
    %vm36 = vcmask 261120
    %v38 = vsel %vm36, %v30, 0
    %v41 = vsel %vm36, %v31, 0
    %v44 = vsel %vm36, %v32, 0
    %v47 = vsel %vm36, %v33, 0
    %v50 = vsel %vm36, %v34, 0
    %v53 = vsel %vm36, %v35, 0
    %55 = vmatpush.xpose.msra.mxu0 0.0
    %56 = vmatpush.xpose.msra.mxu0 0.0
    %57 = vmatpush.xpose.msra.mxu0 0.0
    %58 = vmatpush.xpose.msra.mxu0 0.0
    %59 = vmatpush.xpose.msra.mxu0 0.0
    %60 = vmatpush.xpose.msra.mxu0 0.0
    %61 = vmatpush.xpose.msra.mxu0 0.0
    %62 = vmatpush.xpose.msra.mxu0 0.0
    %63 = vmatpush.xpose.msra.mxu0 0.0
    %64 = vmatpush.xpose.msra.mxu0 0.0
    %65 = vmatpush.xpose.msra.mxu0 0.0
    %66 = vmatpush.xpose.msra.mxu0 0.0
    %67 = vmatpush.xpose.msra.mxu0 %v53
    %68 = vmatpush.xpose.msra.mxu0 %v50
    %69 = vmatpush.xpose.msra.mxu0 %v47
    %70 = vmatpush.xpose.msra.mxu0 %v44
    %71 = vmatmul.f32.gmra.mxu0 %v38
    %v72 = vpop.f32.mrf.mxu0
    %v73 = vadd.f32 0.0, %v72
    %74 = vmatmul.f32.gmra.mxu0 %v41
    %v75 = vpop.f32.mrf.mxu0
    %v76 = vadd.f32 0.0, %v75
    %77 = vdwg.mxu0
    %v78 = vadd.f32 %v28, %v73
    %v79 = vadd.f32 %v29, %v76
    %80 = vst.msk [vmem:[#allocation2] sm:$0xff] %vm36, %v78
    %81 = vst.msk [vmem:[#allocation2 + $0x8] sm:$0xff] %vm36, %v79
    // Predicated region
    $region26: #{tpu_custom_call.1} parent=1 // pred_check
      %p82 = pneg %p21
    $region27: #{tpu_custom_call.1} parent=1 // pred_check_branch
      %84 = sbr.rel (%p82) target = $region29
    $region28: #{tpu_custom_call.1} parent=1 // pred_region
      %v85 = vld [vmem:[%s3] sm:$0xff]
      %v86 = vld [vmem:[%s3 + $0x8] sm:$0xff]
      %v87 = vld [vmem:[%s4] sm:$0xff]
      %v88 = vld [vmem:[%s4 + $0x8] sm:$0xff]
      %v89 = vld [vmem:[%s4 + $0x10] sm:$0xff]
      %v90 = vld [vmem:[%s4 + $0x18] sm:$0xff]
      %vm91 = vcmask 64512
      %v93 = vsel %vm91, %v85, 0
      %v96 = vsel %vm91, %v86, 0
      %v99 = vsel %vm91, %v87, 0
      %v102 = vsel %vm91, %v88, 0
      %v105 = vsel %vm91, %v89, 0
      %v108 = vsel %vm91, %v90, 0
      %110 = vmatpush.xpose.msra.mxu0 0.0
      %111 = vmatpush.xpose.msra.mxu0 0.0
      %112 = vmatpush.xpose.msra.mxu0 0.0
      %113 = vmatpush.xpose.msra.mxu0 0.0
      %114 = vmatpush.xpose.msra.mxu0 0.0
      %115 = vmatpush.xpose.msra.mxu0 0.0
      %116 = vmatpush.xpose.msra.mxu0 0.0
      %117 = vmatpush.xpose.msra.mxu0 0.0
      %118 = vmatpush.xpose.msra.mxu0 0.0
      %119 = vmatpush.xpose.msra.mxu0 0.0
      %120 = vmatpush.xpose.msra.mxu0 0.0
      %121 = vmatpush.xpose.msra.mxu0 0.0
      %122 = vmatpush.xpose.msra.mxu0 %v108
      %123 = vmatpush.xpose.msra.mxu0 %v105
      %124 = vmatpush.xpose.msra.mxu0 %v102
      %125 = vmatpush.xpose.msra.mxu0 %v99
      %126 = vmatmul.f32.gmra.mxu0 %v93
      %v127 = vpop.f32.mrf.mxu0
      %v128 = vadd.f32 0.0, %v127
      %129 = vmatmul.f32.gmra.mxu0 %v96
      %v130 = vpop.f32.mrf.mxu0
      %v131 = vadd.f32 0.0, %v130
      %132 = vdwg.mxu0
      %v133 = vld [vmem:[#allocation2] sm:$0xff]
      %v134 = vld [vmem:[#allocation2 + $0x8] sm:$0xff]
      %v135 = vld [vmem:[%s2] sm:$0x1]
      %v137 = vperm.slane %v135, 0
      %v139 = vadd.f32 %v133, %v137
      %v140 = vadd.f32 %v134, %v137
      %v141 = vadd.f32 %v139, %v128
      %v142 = vadd.f32 %v140, %v131
      %143 = vst.msk [vmem:[#allocation3] sm:$0xff] %vm36, %v141
      %144 = vst.msk [vmem:[#allocation3 + $0x8] sm:$0xff] %vm36, %v142
    $region29: #{tpu_custom_call.1} parent=1 // pred_fallthru
      _
    // Predicated region
    $region30: #{tpu_custom_call.1} parent=1 // pred_check
      _
    $region31: #{tpu_custom_call.1} parent=1 // pred_check_branch
      %146 = sbr.rel (0) target = $region33
    $region32: #{tpu_custom_call.1} parent=1 // pred_region
      %148 = vsyncadd [#allocation4], 0
      %s149 = sshll.u32 [#allocation3], 4
      %s150 = int_to_ptr.vmem [resolvable:$true] %s149
      %s151 = sshll.u32 %s5, 4
      %s152 = int_to_ptr.hbm [resolvable:$true] %s151
      %157 = dma.vmem_to_hbm [thread:$0]  %s150, 256, %s152, [#allocation4], 128, 128, 8
    $region33: #{tpu_custom_call.1} parent=1 // pred_fallthru
      _
    // Predicated region
    $region34: #{tpu_custom_call.1} parent=1 // pred_check
      _
    $region35: #{tpu_custom_call.1} parent=1 // pred_check_branch
      %159 = sbr.rel (0) target = $region37
    $region36: #{tpu_custom_call.1} parent=1 // pred_region
      %161 = dma.done [#allocation4], 256
    $region37: #{tpu_custom_call.1} parent=1 // pred_fallthru
      _
    %162 = vsyncpa [#allocation4], 1

</llo_original>
